<compile_context>
chip_gen: v5e
topology: v5e:2x2
jax: 0.10.0
libtpu: 0.0.40
codegen_flags: <defaults>
</compile_context>

<pallas_src>
import jax
import jax.numpy as jnp
from jax.experimental import pallas as pl
from jax.experimental.pallas import tpu as pltpu


def _tia_mha_kernel(q_ref, k_ref, v_ref, ik_ref, iv_ref, mask_ref,
                    e_ref, et_ref, out_ref):
    """One grid step = (batch element b, query-row tile qi).

    q_ref   : (TQ, D)    pre-projected, pre-scaled queries             f32
    k_ref   : (S,  D)    pre-projected keys   (k@Wk + bk + pos_k)      f32
    v_ref   : (S,  D)    pre-projected values (v@Wv + bv + pos_v)      f32
    ik_ref  : (TQ, S, D) interval-key   block                          bf16/f32
    iv_ref  : (TQ, S, D) interval-value block                          bf16/f32
    mask_ref: (TQ, S)    1 = keep, 0 = mask                            int32
    e_ref   : (D, H)     0/1 head selector; et_ref = e_ref.T           f32
    """
    f32 = jnp.float32
    TQ, D = q_ref.shape
    S = k_ref.shape[0]
    H = e_ref.shape[1]

    Q = q_ref[...]                           # (TQ, D)  already * 1/sqrt(d_k)
    K = k_ref[...]                           # (S, D)
    V = v_ref[...]                           # (S, D)
    ik = ik_ref[...].astype(f32)             # (TQ, S, D)
    iv = iv_ref[...].astype(f32)             # (TQ, S, D)
    E = e_ref[...]                           # (D, H)
    ET = et_ref[...]                         # (H, D)

    # Additive mask, hoisted out of any per-head work.  -1e30 (not -inf) so a
    # fully-masked row gives a uniform distribution instead of NaN.
    add_mask = jnp.where(mask_ref[...] == 0, f32(-1e30), f32(0.0))       # (TQ, S)

    # scores for ALL heads in one lane-dense pass over the interval keys:
    #   scores[i, j, h] = sum_{d in head h} Q[i, d] * (K[j, d] + ik[i, j, d])
    prod = Q[:, None, :] * (K[None, :, :] + ik)                          # (TQ, S, D)
    scores = jnp.dot(prod.reshape(TQ * S, D), E,
                     preferred_element_type=f32).reshape(TQ, S, H)
    scores = scores + add_mask[:, :, None]

    # softmax over the key axis (axis=1).  Row-wise max shift is equivalent to
    # the reference's global-max shift (softmax shift invariance).
    m = jnp.max(scores, axis=1, keepdims=True)
    p = jnp.exp(scores - m)
    denom = jnp.sum(p, axis=1, keepdims=True)
    p = p * pl.reciprocal(denom, approx=True)                            # (TQ, S, H)

    # output for ALL heads in one lane-dense pass over the interval values:
    #   out[i, d] = sum_j p[i, j, head(d)] * (V[j, d] + iv[i, j, d])
    p_rep = jnp.dot(p.reshape(TQ * S, H), ET,
                    preferred_element_type=f32).reshape(TQ, S, D)
    out = jnp.sum(p_rep * (V[None, :, :] + iv), axis=1)                  # (TQ, D)

    # single, lane-dense store (no per-head masked sub-stores)
    out_ref[...] = out.astype(out_ref.dtype)


def _vmem_limit_bytes():
    """Generation-aware scoped-VMEM limit: ~3/4 of physical VMEM, capped.

    v5e/v6e (128 MiB physical) -> 96 MiB; v7x (64 MiB per TC) -> 48 MiB.
    """
    phys = 64 * 1024 * 1024                      # conservative default (v7x)
    try:
        info = pltpu.get_tpu_info()
        phys = int(getattr(info, "vmem_capacity_bytes", phys)) or phys
    except Exception:
        pass
    return min((phys * 3) // 4, 100 * 1024 * 1024)


def _choose_query_tile(S, D, vmem_limit_bytes, interval_itemsize):
    """Largest query tile TQ dividing S whose live working set fits in VMEM.

    Live set per grid step ~ 2x double-buffered ik blocks + 2x iv blocks
    (interval dtype) + ~3 block-sized f32 intermediates (prod, p_rep and the
    (V+iv)/product pass), i.e. per unit of TQ:
        S * D * (4 * interval_itemsize + 3 * 4) bytes.
    """
    per_tq_bytes = S * D * (4 * interval_itemsize + 3 * 4)
    budget = (vmem_limit_bytes * 3) // 4          # headroom for small operands
    candidates = [t for t in (2048, 1024, 512, 256, 128, 64, 32, 16, 8)
                  if t <= S and S % t == 0]
    if not candidates:
        candidates = [S]                          # S < 8 or not a multiple of 8
    for t in candidates:
        if t * per_tq_bytes <= budget:
            return t
    # TODO(synk): for very long sequences also tile the key axis (running
    # softmax over S chunks) instead of failing here.
    raise ValueError(
        f"TimeIntervalMHA: minimum query tile {candidates[-1]} with seq_len={S},"
        f" d_model={D} needs {candidates[-1] * per_tq_bytes} VMEM bytes,"
        f" exceeding the budget of {budget} bytes.")


def time_interval_mha(q, k, v, pos_k, pos_v, inter_k, inter_v, mask,
                      params, n_heads, interval_dtype=jnp.bfloat16):
    """Forward pass of TimeIntervalMultiHeadAttention.

    Set interval_dtype=jnp.float32 for an exact-parity escape hatch.
    """
    bs, S, D = q.shape
    d_k = D // n_heads
    wq, bq, wk, bk, wv, bv = params

    # ---- projections hoisted to XLA (run at full MXU efficiency; negligible
    # flops vs the interval stream).  1/sqrt(d_k) folded into Q so it covers
    # both the q@k^T term and the q*inter_k term identically. -----------------
    scale = jnp.float32(1.0 / (d_k ** 0.5))
    Qp = ((q @ wq + bq) * scale).astype(jnp.float32)          # (bs, S, D)
    Kp = (k @ wk + bk + pos_k).astype(jnp.float32)            # (bs, S, D)
    Vp = (v @ wv + bv + pos_v).astype(jnp.float32)            # (bs, S, D)

    # ---- dominant HBM stream in bf16 (ideally already bf16 upstream so this
    # cast fuses into the producer). ------------------------------------------
    ik = inter_k.astype(interval_dtype)
    iv = inter_v.astype(interval_dtype)

    # 0/1 head-selector matrix: E[d, h] = 1 iff d // d_k == h.
    E = (jnp.arange(D)[:, None] // d_k ==
         jnp.arange(n_heads)[None, :]).astype(jnp.float32)
    ET = E.T

    vmem_limit = _vmem_limit_bytes()
    TQ = _choose_query_tile(S, D, vmem_limit,
                            jnp.dtype(interval_dtype).itemsize)
    n_qt = S // TQ

    spec_q    = pl.BlockSpec((None, TQ, D), lambda b, qi: (b, qi, 0))
    spec_kv   = pl.BlockSpec((None, S, D), lambda b, qi: (b, 0, 0))
    spec_ik   = pl.BlockSpec((None, TQ, S, D), lambda b, qi: (b, qi, 0, 0))
    spec_mask = pl.BlockSpec((None, TQ, S), lambda b, qi: (b, qi, 0))
    spec_e    = pl.BlockSpec((D, n_heads), lambda b, qi: (0, 0))
    spec_et   = pl.BlockSpec((n_heads, D), lambda b, qi: (0, 0))

    return pl.pallas_call(
        _tia_mha_kernel,
        out_shape=jax.ShapeDtypeStruct((bs, S, D), jnp.float32),
        grid=(bs, n_qt),
        in_specs=[spec_q, spec_kv, spec_kv,            # Q (scaled), K, V (projected)
                  spec_ik, spec_ik,                    # inter_k, inter_v (q-tiled, bf16)
                  spec_mask,                           # mask (q-tiled)
                  spec_e, spec_et],                    # head selector (+ transpose)
        out_specs=spec_q,
        compiler_params=pltpu.CompilerParams(
            # No cross-step scratch carry -> both grid axes independent; on
            # v7x this lets both TensorCores shard over (batch, query tile).
            dimension_semantics=("parallel", "parallel"),
            vmem_limit_bytes=vmem_limit),
    )(Qp, Kp, Vp, ik, iv, mask, E, ET)


def reference(q, k, v, pos_k, pos_v, inter_k, inter_v, mask, params, n_heads):
    """Pure-JAX (f32) port of the PyTorch forward for validation."""
    wq, bq, wk, bk, wv, bv = params
    bs, S, D = q.shape
    d_k = D // n_heads
    K = (k @ wk + bk + pos_k).reshape(bs, S, n_heads, d_k).transpose(0, 2, 1, 3)
    Q = (q @ wq + bq).reshape(bs, S, n_heads, d_k).transpose(0, 2, 1, 3)
    V = (v @ wv + bv + pos_v).reshape(bs, S, n_heads, d_k).transpose(0, 2, 1, 3)
    ik = inter_k.reshape(bs, S, S, n_heads, d_k).transpose(0, 3, 1, 2, 4)
    iv = inter_v.reshape(bs, S, S, n_heads, d_k).transpose(0, 3, 1, 2, 4)
    scores = jnp.einsum('bhid,bhjd->bhij', Q, K)
    scores = scores + jnp.einsum('bhid,bhijd->bhij', Q, ik)
    scores = scores / d_k ** 0.5
    scores = jnp.where(mask[:, None, :, :] == 0, -jnp.inf, scores)
    p = jax.nn.softmax(scores, axis=-1)
    out = jnp.einsum('bhij,bhjd->bhid', p, V)
    out = out + jnp.einsum('bhij,bhijd->bhid', p, iv)
    return out.transpose(0, 2, 1, 3).reshape(bs, S, D)


if __name__ == "__main__":
    bs, S, D, H = 2, 8, 32, 4     # batch, seq_len, d_model, n_heads (d_k = 8)

    key = jax.random.PRNGKey(0)
    ks = jax.random.split(key, 13)
    q = jax.random.normal(ks[0], (bs, S, D), jnp.float32)
    k = jax.random.normal(ks[1], (bs, S, D), jnp.float32)
    v = jax.random.normal(ks[2], (bs, S, D), jnp.float32)
    pos_k = 0.1 * jax.random.normal(ks[3], (bs, S, D), jnp.float32)
    pos_v = 0.1 * jax.random.normal(ks[4], (bs, S, D), jnp.float32)
    inter_k = 0.1 * jax.random.normal(ks[5], (bs, S, S, D), jnp.float32)
    inter_v = 0.1 * jax.random.normal(ks[6], (bs, S, S, D), jnp.float32)

    # causal mask, broadcast over batch / heads
    mask = jnp.broadcast_to(jnp.tril(jnp.ones((S, S), jnp.int32)), (bs, S, S))
    mask = jnp.asarray(mask)

    # deterministic parameter init (kq_same=False, bias=True)
    wq = 0.1 * jax.random.normal(ks[7], (D, D), jnp.float32)
    wk = 0.1 * jax.random.normal(ks[8], (D, D), jnp.float32)
    wv = 0.1 * jax.random.normal(ks[9], (D, D), jnp.float32)
    bq = 0.1 * jax.random.normal(ks[10], (D,), jnp.float32)
    bk = 0.1 * jax.random.normal(ks[11], (D,), jnp.float32)
    bv = 0.1 * jax.random.normal(ks[12], (D,), jnp.float32)
    params = (wq, bq, wk, bk, wv, bv)

    out = time_interval_mha(q, k, v, pos_k, pos_v, inter_k, inter_v, mask,
                            params, n_heads=H)
    out = jax.block_until_ready(out)

    ref = jax.block_until_ready(
        reference(q, k, v, pos_k, pos_v, inter_k, inter_v, mask, params, H))

    assert out.shape == (bs, S, D)
    # tolerance accounts for bf16 streaming of inter_k/inter_v and the
    # approximate reciprocal in the softmax normalization
    assert bool(jnp.allclose(out, ref, atol=2e-2, rtol=2e-2)), "mismatch vs reference"
    print("KERNEL_OK")
</pallas_src>

<mosaic_0001>
module attributes {stable_mosaic.version = 11 : i64} {
  func.func @_tia_mha_kernel(%arg0: i32, %arg1: i32, %arg2: memref<1x8x32xf32, #tpu.memory_space<vmem>>, %arg3: memref<1x8x32xf32, #tpu.memory_space<vmem>>, %arg4: memref<1x8x32xf32, #tpu.memory_space<vmem>>, %arg5: memref<1x8x8x32xbf16, #tpu.memory_space<vmem>>, %arg6: memref<1x8x8x32xbf16, #tpu.memory_space<vmem>>, %arg7: memref<1x8x8xi32, #tpu.memory_space<vmem>>, %arg8: memref<32x4xf32, #tpu.memory_space<vmem>>, %arg9: memref<4x32xf32, #tpu.memory_space<vmem>>, %arg10: memref<1x8x32xf32, #tpu.memory_space<vmem>>) attributes {dimension_semantics = [#tpu.dimension_semantics<parallel>, #tpu.dimension_semantics<parallel>], iteration_bounds = array<i64: 2, 1>, scalar_prefetch = 0 : i64, scratch_operands = 0 : i64, tpu.core_type = #tpu.core_type<tc>, window_params = [{transform_indices = @transform_0, window_bounds = array<i64: 1, 8, 32>}, {transform_indices = @transform_1, window_bounds = array<i64: 1, 8, 32>}, {transform_indices = @transform_2, window_bounds = array<i64: 1, 8, 32>}, {transform_indices = @transform_3, window_bounds = array<i64: 1, 8, 8, 32>}, {transform_indices = @transform_4, window_bounds = array<i64: 1, 8, 8, 32>}, {transform_indices = @transform_5, window_bounds = array<i64: 1, 8, 8>}, {pipeline_mode = #tpu.pipeline_mode<synchronous>, transform_indices = @transform_6, window_bounds = array<i64: 32, 4>}, {pipeline_mode = #tpu.pipeline_mode<synchronous>, transform_indices = @transform_7, window_bounds = array<i64: 4, 32>}, {transform_indices = @transform_8, window_bounds = array<i64: 1, 8, 32>}]} {
    %c0 = arith.constant 0 : index
    %c0_0 = arith.constant 0 : index
    %c0_1 = arith.constant 0 : index
    %0 = vector.load %arg2[%c0, %c0_0, %c0_1] : memref<1x8x32xf32, #tpu.memory_space<vmem>>, vector<1x8x32xf32>
    %1 = vector.shape_cast %0 : vector<1x8x32xf32> to vector<8x32xf32>
    %c0_2 = arith.constant 0 : index
    %c0_3 = arith.constant 0 : index
    %c0_4 = arith.constant 0 : index
    %2 = vector.load %arg3[%c0_2, %c0_3, %c0_4] : memref<1x8x32xf32, #tpu.memory_space<vmem>>, vector<1x8x32xf32>
    %3 = vector.shape_cast %2 : vector<1x8x32xf32> to vector<8x32xf32>
    %c0_5 = arith.constant 0 : index
    %c0_6 = arith.constant 0 : index
    %c0_7 = arith.constant 0 : index
    %4 = vector.load %arg4[%c0_5, %c0_6, %c0_7] : memref<1x8x32xf32, #tpu.memory_space<vmem>>, vector<1x8x32xf32>
    %5 = vector.shape_cast %4 : vector<1x8x32xf32> to vector<8x32xf32>
    %c0_8 = arith.constant 0 : index
    %c0_9 = arith.constant 0 : index
    %c0_10 = arith.constant 0 : index
    %c0_11 = arith.constant 0 : index
    %6 = vector.load %arg5[%c0_8, %c0_9, %c0_10, %c0_11] : memref<1x8x8x32xbf16, #tpu.memory_space<vmem>>, vector<1x8x8x32xbf16>
    %7 = vector.shape_cast %6 : vector<1x8x8x32xbf16> to vector<8x8x32xbf16>
    %8 = arith.extf %7 : vector<8x8x32xbf16> to vector<8x8x32xf32>
    %c0_12 = arith.constant 0 : index
    %c0_13 = arith.constant 0 : index
    %c0_14 = arith.constant 0 : index
    %c0_15 = arith.constant 0 : index
    %9 = vector.load %arg6[%c0_12, %c0_13, %c0_14, %c0_15] : memref<1x8x8x32xbf16, #tpu.memory_space<vmem>>, vector<1x8x8x32xbf16>
    %10 = vector.shape_cast %9 : vector<1x8x8x32xbf16> to vector<8x8x32xbf16>
    %11 = arith.extf %10 : vector<8x8x32xbf16> to vector<8x8x32xf32>
    %c0_16 = arith.constant 0 : index
    %c0_17 = arith.constant 0 : index
    %12 = vector.load %arg8[%c0_16, %c0_17] : memref<32x4xf32, #tpu.memory_space<vmem>>, vector<32x4xf32>
    %c0_18 = arith.constant 0 : index
    %c0_19 = arith.constant 0 : index
    %13 = vector.load %arg9[%c0_18, %c0_19] : memref<4x32xf32, #tpu.memory_space<vmem>>, vector<4x32xf32>
    %c0_20 = arith.constant 0 : index
    %c0_21 = arith.constant 0 : index
    %c0_22 = arith.constant 0 : index
    %14 = vector.load %arg7[%c0_20, %c0_21, %c0_22] : memref<1x8x8xi32, #tpu.memory_space<vmem>>, vector<1x8x8xi32>
    %15 = vector.shape_cast %14 : vector<1x8x8xi32> to vector<8x8xi32>
    %c0_i32 = arith.constant 0 : i32
    %16 = vector.broadcast %c0_i32 : i32 to vector<8x8xi32>
    %17 = arith.cmpi eq, %15, %16 : vector<8x8xi32>
    %cst = arith.constant -1.000000e+30 : f32
    %cst_23 = arith.constant 0.000000e+00 : f32
    %18 = vector.broadcast %cst : f32 to vector<8x8xf32>
    %19 = vector.broadcast %cst_23 : f32 to vector<8x8xf32>
    %20 = arith.select %17, %18, %19 : vector<8x8xi1>, vector<8x8xf32>
    %21 = vector.shape_cast %1 : vector<8x32xf32> to vector<8x1x32xf32>
    %22 = vector.shape_cast %3 : vector<8x32xf32> to vector<1x8x32xf32>
    %23 = vector.broadcast %22 : vector<1x8x32xf32> to vector<8x8x32xf32>
    %24 = arith.addf %23, %8 : vector<8x8x32xf32>
    %25 = vector.broadcast %21 : vector<8x1x32xf32> to vector<8x8x32xf32>
    %26 = arith.mulf %25, %24 : vector<8x8x32xf32>
    %27 = vector.shape_cast %26 : vector<8x8x32xf32> to vector<64x32xf32>
    %cst_24 = arith.constant dense<0.000000e+00> : vector<64x4xf32>
    %28 = tpu.matmul %27, %12, %cst_24 {dimension_numbers = #tpu.dot_dimension_numbers<[1], [0], [0], [1], [0, 0, 1, 1], [], []>} : vector<64x32xf32>, vector<32x4xf32>, vector<64x4xf32> -> vector<64x4xf32>
    %29 = vector.shape_cast %28 : vector<64x4xf32> to vector<8x8x4xf32>
    %30 = vector.shape_cast %20 : vector<8x8xf32> to vector<8x8x1xf32>
    %31 = vector.broadcast %30 : vector<8x8x1xf32> to vector<8x8x4xf32>
    %32 = arith.addf %29, %31 : vector<8x8x4xf32>
    %cst_25 = arith.constant dense<0xFF800000> : vector<8x4xf32>
    %33 = vector.multi_reduction <maximumf>, %32, %cst_25 [1] : vector<8x8x4xf32> to vector<8x4xf32>
    %34 = vector.shape_cast %33 : vector<8x4xf32> to vector<8x1x4xf32>
    %35 = vector.broadcast %34 : vector<8x1x4xf32> to vector<8x8x4xf32>
    %36 = arith.subf %32, %35 : vector<8x8x4xf32>
    %37 = math.exp %36 : vector<8x8x4xf32>
    %cst_26 = arith.constant dense<0.000000e+00> : vector<8x4xf32>
    %38 = vector.multi_reduction <add>, %37, %cst_26 [1] : vector<8x8x4xf32> to vector<8x4xf32>
    %39 = vector.shape_cast %38 : vector<8x4xf32> to vector<8x1x4xf32>
    %40 = tpu.reciprocal %39 {approx = true} : vector<8x1x4xf32> -> vector<8x1x4xf32>
    %41 = vector.broadcast %40 : vector<8x1x4xf32> to vector<8x8x4xf32>
    %42 = arith.mulf %37, %41 : vector<8x8x4xf32>
    %43 = vector.shape_cast %42 : vector<8x8x4xf32> to vector<64x4xf32>
    %cst_27 = arith.constant dense<0.000000e+00> : vector<64x32xf32>
    %44 = tpu.matmul %43, %13, %cst_27 {dimension_numbers = #tpu.dot_dimension_numbers<[1], [0], [0], [1], [0, 0, 1, 1], [], []>} : vector<64x4xf32>, vector<4x32xf32>, vector<64x32xf32> -> vector<64x32xf32>
    %45 = vector.shape_cast %44 : vector<64x32xf32> to vector<8x8x32xf32>
    %46 = vector.shape_cast %5 : vector<8x32xf32> to vector<1x8x32xf32>
    %47 = vector.broadcast %46 : vector<1x8x32xf32> to vector<8x8x32xf32>
    %48 = arith.addf %47, %11 : vector<8x8x32xf32>
    %49 = arith.mulf %45, %48 : vector<8x8x32xf32>
    %cst_28 = arith.constant dense<0.000000e+00> : vector<8x32xf32>
    %50 = vector.multi_reduction <add>, %49, %cst_28 [1] : vector<8x8x32xf32> to vector<8x32xf32>
    %c0_29 = arith.constant 0 : index
    %c0_30 = arith.constant 0 : index
    %c0_31 = arith.constant 0 : index
    %51 = vector.load %arg10[%c0_29, %c0_30, %c0_31] : memref<1x8x32xf32, #tpu.memory_space<vmem>>, vector<1x8x32xf32>
    %52 = vector.shape_cast %51 : vector<1x8x32xf32> to vector<8x32xf32>
    %53 = vector.shape_cast %50 : vector<8x32xf32> to vector<1x8x32xf32>
    tpu.vector_store %arg10[%c0_29, %c0_30, %c0_31], %53 {strides = array<i32>} : memref<1x8x32xf32, #tpu.memory_space<vmem>>, vector<1x8x32xf32>,
    return
  }
  func.func @transform_0(%arg0: i32, %arg1: i32) -> (i32, i32, i32) {
    %c0_i32 = arith.constant 0 : i32
    %c0_i32_0 = arith.constant 0 : i32
    return %arg0, %arg1, %c0_i32 : i32, i32, i32
  }
  func.func @transform_1(%arg0: i32, %arg1: i32) -> (i32, i32, i32) {
    %c0_i32 = arith.constant 0 : i32
    %c0_i32_0 = arith.constant 0 : i32
    %c0_i32_1 = arith.constant 0 : i32
    return %arg0, %c0_i32, %c0_i32_0 : i32, i32, i32
  }
  func.func @transform_2(%arg0: i32, %arg1: i32) -> (i32, i32, i32) {
    %c0_i32 = arith.constant 0 : i32
    %c0_i32_0 = arith.constant 0 : i32
    %c0_i32_1 = arith.constant 0 : i32
    return %arg0, %c0_i32, %c0_i32_0 : i32, i32, i32
  }
  func.func @transform_3(%arg0: i32, %arg1: i32) -> (i32, i32, i32, i32) {
    %c0_i32 = arith.constant 0 : i32
    %c0_i32_0 = arith.constant 0 : i32
    %c0_i32_1 = arith.constant 0 : i32
    return %arg0, %arg1, %c0_i32, %c0_i32_0 : i32, i32, i32, i32
  }
  func.func @transform_4(%arg0: i32, %arg1: i32) -> (i32, i32, i32, i32) {
    %c0_i32 = arith.constant 0 : i32
    %c0_i32_0 = arith.constant 0 : i32
    %c0_i32_1 = arith.constant 0 : i32
    return %arg0, %arg1, %c0_i32, %c0_i32_0 : i32, i32, i32, i32
  }
  func.func @transform_5(%arg0: i32, %arg1: i32) -> (i32, i32, i32) {
    %c0_i32 = arith.constant 0 : i32
    %c0_i32_0 = arith.constant 0 : i32
    return %arg0, %arg1, %c0_i32 : i32, i32, i32
  }
  func.func @transform_6(%arg0: i32, %arg1: i32) -> (i32, i32) {
    %c0_i32 = arith.constant 0 : i32
    %c0_i32_0 = arith.constant 0 : i32
    %c0_i32_1 = arith.constant 0 : i32
    return %c0_i32, %c0_i32_0 : i32, i32
  }
  func.func @transform_7(%arg0: i32, %arg1: i32) -> (i32, i32) {
    %c0_i32 = arith.constant 0 : i32
    %c0_i32_0 = arith.constant 0 : i32
    %c0_i32_1 = arith.constant 0 : i32
    return %c0_i32, %c0_i32_0 : i32, i32
  }
  func.func @transform_8(%arg0: i32, %arg1: i32) -> (i32, i32, i32) {
    %c0_i32 = arith.constant 0 : i32
    %c0_i32_0 = arith.constant 0 : i32
    return %arg0, %arg1, %c0_i32 : i32, i32, i32
  }
}

</mosaic_0001>

<llo_original>
// kernel: tpu_custom_call.1
$region0: #{tpu_custom_call.1}
  #allocation0 [shape = 'u32[]', space=smem, size = 0x4, offset = 0x4, fixed_abs, tag = 'smem constant byte address 0x4 - core index']
  #allocation1 [shape = 'u32[72,128]{1,0:T(1,128)}', space=vmem, size = 0x9000, scoped, tag = 'internal scratch']
  %s0 = inlined_call_operand.vmem [shape: f32[2,8,32], index: 0, kind: input, shape index: {}]
  %s1 = inlined_call_operand.vmem [shape: f32[2,8,32], index: 1, kind: input, shape index: {}]
  %s2 = inlined_call_operand.hbm [shape: f32[2,8,32], index: 2, kind: input, shape index: {}]
  %s3 = inlined_call_operand.hbm [shape: bf16[2,8,8,32], index: 3, kind: input, shape index: {}]
  %s4 = inlined_call_operand.hbm [shape: bf16[2,8,8,32], index: 4, kind: input, shape index: {}]
  %s5 = inlined_call_operand.hbm [shape: s32[2,8,8], index: 5, kind: input, shape index: {}]
  %s6 = inlined_call_operand.vmem [shape: f32[32,4], index: 6, kind: input, shape index: {}]
  %s7 = inlined_call_operand.vmem [shape: f32[4,32], index: 7, kind: input, shape index: {}]
  %s8 = inlined_call_operand.hbm [shape: f32[2,8,32], index: 8, kind: output, shape index: {}]
  %s9 = sld [smem:[#allocation0]]
  $region81: #{tpu_custom_call.1} parent=0
    _
  %s11 = ssub.s32 1, %s9
  %s12 = scalar_select 0, %s11, %s9
  $region1: #{tpu_custom_call.1} parent=0
    #allocation2 [shape = 'u8[8192]{0}', space=vmem, size = 0x2000, scoped, tag = 'input window, operand 2']
    #allocation3 [shape = 's32[2]{0}', space=sflag, size = 0x8, scoped, tag = 'scoped memory for tpu_custom_call.1']
    #allocation4 [shape = 's32[2]{0}', space=sflag, size = 0x8, scoped, tag = 'scoped memory for tpu_custom_call.1']
    #allocation5 [shape = 'u8[32768]{0}', space=vmem, size = 0x8000, scoped, tag = 'input window, operand 3']
    #allocation6 [shape = 's32[2]{0}', space=sflag, size = 0x8, scoped, tag = 'scoped memory for tpu_custom_call.1']
    #allocation7 [shape = 'u8[32768]{0}', space=vmem, size = 0x8000, scoped, tag = 'input window, operand 4']
    #allocation8 [shape = 'u8[8192]{0}', space=vmem, size = 0x2000, scoped, tag = 'input window, operand 5']
    #allocation9 [shape = 's32[2]{0}', space=sflag, size = 0x8, scoped, tag = 'scoped memory for tpu_custom_call.1']
    #allocation10 [shape = 'u8[8192]{0}', space=vmem, size = 0x2000, scoped, tag = 'output window, operand 0']
    %13 = vsyncpa [#allocation3], 0
    %s14 = scalar_lea.sflag [#allocation3], 1
    %15 = vsyncpa %s14, 0
    %16 = vsyncpa [#allocation6], 0
    %s17 = scalar_lea.sflag [#allocation6], 1
    %18 = vsyncpa %s17, 0
    %19 = vsyncpa [#allocation9], 0
    %s20 = scalar_lea.sflag [#allocation9], 1
    %21 = vsyncpa %s20, 0
    %22 = vsyncpa [#allocation4], 0
    %s23 = scalar_lea.sflag [#allocation4], 1
    %24 = vsyncpa %s23, 0
    loop: start=0, step=1, limit=4
    $region2: #{tpu_custom_call.1} parent=1 // loop_pre_header
      _
    $region3: #{tpu_custom_call.1} parent=1 // loop_header
      %s26 = sphi 0, %s30
      %p27 = scmp.ge.s32.totalorder %s26, 4
      %s33 = sphi 0, %s45
      %s34 = sphi 0, %s41
      %s35 = sphi 0, %s33
      %s36 = sphi 0, %s34
      %s37 = sphi 0, %s35
      %s38 = sphi 0, %s36
      %s50 = sphi 0, %s52
      %s53 = sphi 0, %s50
      %s54 = sphi 0, %s53
      %s70 = sphi 0, %s54
      %s76 = sphi 0, %s78
      %s79 = sphi 0, %s76
      %s80 = sphi 0, %s79
      %s96 = sphi 0, %s80
      %s102 = sphi 0, %s104
      %s105 = sphi 0, %s102
      %s106 = sphi 0, %s105
      %s122 = sphi 0, %s106
      %s130 = sphi 0, %s132
      %s133 = sphi 0, %s130
      %s134 = sphi 0, %s133
      %s150 = sphi 0, %s134
      %s158 = sphi 0, %s160
      %s161 = sphi 0, %s158
      %s162 = sphi 0, %s161
      %s178 = sphi 0, %s162
      %s186 = sphi 0, %s188
      %s189 = sphi 0, %s186
      %s190 = sphi 0, %s189
      %s206 = sphi 0, %s190
      %s210 = sphi 0, %s210
      %s212 = sphi 0, %s210
      %s213 = sphi 0, %s212
      %s227 = sphi 0, %s213
      %s231 = sphi 0, %s231
      %s233 = sphi 0, %s231
      %s234 = sphi 0, %s233
      %s248 = sphi 0, %s234
      %s256 = sphi 0, %s258
      %s259 = sphi 0, %s256
      %s260 = sphi 0, %s259
      %s276 = sphi 0, %s260
    $region4: #{tpu_custom_call.1} parent=1 // loop_header_branch
      %29 = sbr.rel (%p27) target = $region8
    $region5: #{tpu_custom_call.1} parent=1 // loop_body
      %s31 = ssub.s32 %s26, 1
      %s32 = ssub.s32 %s26, 2
      %s39 = sadd.s32 1, %s34
      %p40 = scmp.ge.s32.totalorder %s39, 1
      %s41 = scalar_select %p40, 0, %s39
      %s42 = sadd.s32 1, %s33
      %s43 = scalar_select %p40, %s42, %s33
      %p44 = scmp.ge.s32.totalorder %s43, 2
      %s45 = scalar_select %p44, 0, %s43
      %s46 = ssub.s32 %s33, %s45
      %s47 = ssub.s32 %s34, %s41
      %s48 = sor.u32 %s46, %s47
      %p49 = scmp.eq.s32.totalorder %s48, 0
      %s51 = sadd.s32 %s50, 1
      %s52 = scalar_select %p49, %s50, %s51
      %p55 = pneg %p49
      %p56 = scmp.eq.s32.totalorder %s26, 1
      %p57 = por %p55, %p56
      %p58 = scmp.ne.s32.totalorder %s50, %s53
      %p59 = scmp.eq.s32.totalorder %s26, 0
      %p60 = por %p58, %p59
      %p61 = scmp.ne.s32.totalorder %s50, %s53
      %p62 = scmp.eq.s32.totalorder %s31, 1
      %p63 = por %p61, %p62
      %p64 = scmp.ne.s32.totalorder %s53, %s54
      %p65 = scmp.eq.s32.totalorder %s31, 0
      %p66 = por %p64, %p65
      %p67 = scmp.ne.s32.totalorder %s53, %s54
      %p68 = scmp.eq.s32.totalorder %s32, 1
      %p69 = por %p67, %p68
      %p71 = scmp.ne.s32.totalorder %s54, %s70
      %p72 = scmp.eq.s32.totalorder %s32, 0
      %p73 = por %p71, %p72
      %s74 = ssub.s32 %s33, %s45
      %p75 = scmp.eq.s32.totalorder %s74, 0
      %s77 = sadd.s32 %s76, 1
      %s78 = scalar_select %p75, %s76, %s77
      %p81 = pneg %p75
      %p82 = scmp.eq.s32.totalorder %s26, 1
      %p83 = por %p81, %p82
      %p84 = scmp.ne.s32.totalorder %s76, %s79
      %p85 = scmp.eq.s32.totalorder %s26, 0
      %p86 = por %p84, %p85
      %p87 = scmp.ne.s32.totalorder %s76, %s79
      %p88 = scmp.eq.s32.totalorder %s31, 1
      %p89 = por %p87, %p88
      %p90 = scmp.ne.s32.totalorder %s79, %s80
      %p91 = scmp.eq.s32.totalorder %s31, 0
      %p92 = por %p90, %p91
      %p93 = scmp.ne.s32.totalorder %s79, %s80
      %p94 = scmp.eq.s32.totalorder %s32, 1
      %p95 = por %p93, %p94
      %p97 = scmp.ne.s32.totalorder %s80, %s96
      %p98 = scmp.eq.s32.totalorder %s32, 0
      %p99 = por %p97, %p98
      %s100 = ssub.s32 %s33, %s45
      %p101 = scmp.eq.s32.totalorder %s100, 0
      %s103 = sadd.s32 %s102, 1
      %s104 = scalar_select %p101, %s102, %s103
      %p107 = pneg %p101
      %p108 = scmp.eq.s32.totalorder %s26, 1
      %p109 = por %p107, %p108
      %p110 = scmp.ne.s32.totalorder %s102, %s105
      %p111 = scmp.eq.s32.totalorder %s26, 0
      %p112 = por %p110, %p111
      %p113 = scmp.ne.s32.totalorder %s102, %s105
      %p114 = scmp.eq.s32.totalorder %s31, 1
      %p115 = por %p113, %p114
      %p116 = scmp.ne.s32.totalorder %s105, %s106
      %p117 = scmp.eq.s32.totalorder %s31, 0
      %p118 = por %p116, %p117
      %p119 = scmp.ne.s32.totalorder %s105, %s106
      %p120 = scmp.eq.s32.totalorder %s32, 1
      %p121 = por %p119, %p120
      %p123 = scmp.ne.s32.totalorder %s106, %s122
      %p124 = scmp.eq.s32.totalorder %s32, 0
      %p125 = por %p123, %p124
      %s126 = ssub.s32 %s33, %s45
      %s127 = ssub.s32 %s34, %s41
      %s128 = sor.u32 %s126, %s127
      %p129 = scmp.eq.s32.totalorder %s128, 0
      %s131 = sadd.s32 %s130, 1
      %s132 = scalar_select %p129, %s130, %s131
      %p135 = pneg %p129
      %p136 = scmp.eq.s32.totalorder %s26, 1
      %p137 = por %p135, %p136
      %p138 = scmp.ne.s32.totalorder %s130, %s133
      %p139 = scmp.eq.s32.totalorder %s26, 0
      %p140 = por %p138, %p139
      %p141 = scmp.ne.s32.totalorder %s130, %s133
      %p142 = scmp.eq.s32.totalorder %s31, 1
      %p143 = por %p141, %p142
      %p144 = scmp.ne.s32.totalorder %s133, %s134
      %p145 = scmp.eq.s32.totalorder %s31, 0
      %p146 = por %p144, %p145
      %p147 = scmp.ne.s32.totalorder %s133, %s134
      %p148 = scmp.eq.s32.totalorder %s32, 1
      %p149 = por %p147, %p148
      %p151 = scmp.ne.s32.totalorder %s134, %s150
      %p152 = scmp.eq.s32.totalorder %s32, 0
      %p153 = por %p151, %p152
      %s154 = ssub.s32 %s33, %s45
      %s155 = ssub.s32 %s34, %s41
      %s156 = sor.u32 %s154, %s155
      %p157 = scmp.eq.s32.totalorder %s156, 0
      %s159 = sadd.s32 %s158, 1
      %s160 = scalar_select %p157, %s158, %s159
      %p163 = pneg %p157
      %p164 = scmp.eq.s32.totalorder %s26, 1
      %p165 = por %p163, %p164
      %p166 = scmp.ne.s32.totalorder %s158, %s161
      %p167 = scmp.eq.s32.totalorder %s26, 0
      %p168 = por %p166, %p167
      %p169 = scmp.ne.s32.totalorder %s158, %s161
      %p170 = scmp.eq.s32.totalorder %s31, 1
      %p171 = por %p169, %p170
      %p172 = scmp.ne.s32.totalorder %s161, %s162
      %p173 = scmp.eq.s32.totalorder %s31, 0
      %p174 = por %p172, %p173
      %p175 = scmp.ne.s32.totalorder %s161, %s162
      %p176 = scmp.eq.s32.totalorder %s32, 1
      %p177 = por %p175, %p176
      %p179 = scmp.ne.s32.totalorder %s162, %s178
      %p180 = scmp.eq.s32.totalorder %s32, 0
      %p181 = por %p179, %p180
      %s182 = ssub.s32 %s33, %s45
      %s183 = ssub.s32 %s34, %s41
      %s184 = sor.u32 %s182, %s183
      %p185 = scmp.eq.s32.totalorder %s184, 0
      %s187 = sadd.s32 %s186, 1
      %s188 = scalar_select %p185, %s186, %s187
      %p191 = pneg %p185
      %p192 = scmp.eq.s32.totalorder %s26, 1
      %p193 = por %p191, %p192
      %p194 = scmp.ne.s32.totalorder %s186, %s189
      %p195 = scmp.eq.s32.totalorder %s26, 0
      %p196 = por %p194, %p195
      %p197 = scmp.ne.s32.totalorder %s186, %s189
      %p198 = scmp.eq.s32.totalorder %s31, 1
      %p199 = por %p197, %p198
      %p200 = scmp.ne.s32.totalorder %s189, %s190
      %p201 = scmp.eq.s32.totalorder %s31, 0
      %p202 = por %p200, %p201
      %p203 = scmp.ne.s32.totalorder %s189, %s190
      %p204 = scmp.eq.s32.totalorder %s32, 1
      %p205 = por %p203, %p204
      %p207 = scmp.ne.s32.totalorder %s190, %s206
      %p208 = scmp.eq.s32.totalorder %s32, 0
      %p209 = por %p207, %p208
      %s211 = sadd.s32 %s210, 1
      %p214 = scmp.eq.s32.totalorder %s26, 1
      %p215 = scmp.ne.s32.totalorder %s210, %s212
      %p216 = scmp.eq.s32.totalorder %s26, 0
      %p217 = por %p215, %p216
      %p218 = scmp.ne.s32.totalorder %s210, %s212
      %p219 = scmp.eq.s32.totalorder %s31, 1
      %p220 = por %p218, %p219
      %p221 = scmp.ne.s32.totalorder %s212, %s213
      %p222 = scmp.eq.s32.totalorder %s31, 0
      %p223 = por %p221, %p222
      %p224 = scmp.ne.s32.totalorder %s212, %s213
      %p225 = scmp.eq.s32.totalorder %s32, 1
      %p226 = por %p224, %p225
      %p228 = scmp.ne.s32.totalorder %s213, %s227
      %p229 = scmp.eq.s32.totalorder %s32, 0
      %p230 = por %p228, %p229
      %s232 = sadd.s32 %s231, 1
      %p235 = scmp.eq.s32.totalorder %s26, 1
      %p236 = scmp.ne.s32.totalorder %s231, %s233
      %p237 = scmp.eq.s32.totalorder %s26, 0
      %p238 = por %p236, %p237
      %p239 = scmp.ne.s32.totalorder %s231, %s233
      %p240 = scmp.eq.s32.totalorder %s31, 1
      %p241 = por %p239, %p240
      %p242 = scmp.ne.s32.totalorder %s233, %s234
      %p243 = scmp.eq.s32.totalorder %s31, 0
      %p244 = por %p242, %p243
      %p245 = scmp.ne.s32.totalorder %s233, %s234
      %p246 = scmp.eq.s32.totalorder %s32, 1
      %p247 = por %p245, %p246
      %p249 = scmp.ne.s32.totalorder %s234, %s248
      %p250 = scmp.eq.s32.totalorder %s32, 0
      %p251 = por %p249, %p250
      %s252 = ssub.s32 %s33, %s45
      %s253 = ssub.s32 %s34, %s41
      %s254 = sor.u32 %s252, %s253
      %p255 = scmp.eq.s32.totalorder %s254, 0
      %s257 = sadd.s32 %s256, 1
      %s258 = scalar_select %p255, %s256, %s257
      %p261 = pneg %p255
      %p262 = scmp.eq.s32.totalorder %s26, 1
      %p263 = por %p261, %p262
      %p264 = scmp.ne.s32.totalorder %s256, %s259
      %p265 = scmp.eq.s32.totalorder %s26, 0
      %p266 = por %p264, %p265
      %p267 = scmp.ne.s32.totalorder %s256, %s259
      %p268 = scmp.eq.s32.totalorder %s31, 1
      %p269 = por %p267, %p268
      %p270 = scmp.ne.s32.totalorder %s259, %s260
      %p271 = scmp.eq.s32.totalorder %s31, 0
      %p272 = por %p270, %p271
      %p273 = scmp.ne.s32.totalorder %s259, %s260
      %p274 = scmp.eq.s32.totalorder %s32, 1
      %p275 = por %p273, %p274
      %p277 = scmp.ne.s32.totalorder %s260, %s276
      %p278 = scmp.eq.s32.totalorder %s32, 0
      %p279 = por %p277, %p278
      %p280 = scmp.le.s32.totalorder 1, %s26
      %p281 = scmp.lt.s32.totalorder %s26, 3
      %p282 = pnand %p280, %p281
      %p283 = pneg %p282
      // Predicated region
      $region9: #{tpu_custom_call.1} parent=5 // pred_check
        _
      $region10: #{tpu_custom_call.1} parent=5 // pred_check_branch
        %285 = sbr.rel (%p282) target = $region12
      $region11: #{tpu_custom_call.1} parent=5 // pred_region
        %s286 = ssub.s32 %s26, 1
        // Predicated region
        $region13: #{tpu_custom_call.1} parent=11 // pred_check
          %p287 = pneg %p223
        $region14: #{tpu_custom_call.1} parent=11 // pred_check_branch
          %289 = sbr.rel (%p287) target = $region16
        $region15: #{tpu_custom_call.1} parent=11 // pred_region
          _
        $region16: #{tpu_custom_call.1} parent=11 // pred_fallthru
          _
        // Predicated region
        $region17: #{tpu_custom_call.1} parent=11 // pred_check
          %p290 = pneg %p244
        $region18: #{tpu_custom_call.1} parent=11 // pred_check_branch
          %292 = sbr.rel (%p290) target = $region20
        $region19: #{tpu_custom_call.1} parent=11 // pred_region
          _
        $region20: #{tpu_custom_call.1} parent=11 // pred_fallthru
          _
      $region12: #{tpu_custom_call.1} parent=5 // pred_fallthru
        _
      %p293 = scmp.lt.s32.totalorder %s26, 2
      // Predicated region
      $region21: #{tpu_custom_call.1} parent=5 // pred_check
        %p294 = pneg %p293
      $region22: #{tpu_custom_call.1} parent=5 // pred_check_branch
        %296 = sbr.rel (%p294) target = $region24
      $region23: #{tpu_custom_call.1} parent=5 // pred_region
        // Predicated region
        $region25: #{tpu_custom_call.1} parent=23 // pred_check
          %p297 = pneg %p60
        $region26: #{tpu_custom_call.1} parent=23 // pred_check_branch
          %299 = sbr.rel (%p297) target = $region28
        $region27: #{tpu_custom_call.1} parent=23 // pred_region
          %p300 = scmp.lt.s32.totalorder %s33, 1
          %s301 = scalar_select %p300, %s33, 1
          %p302 = scmp.lt.s32.totalorder %s34, 0
          %s303 = scalar_select %p302, %s34, 0
          %s304 = sadd.s32 %s303, %s301
          %s305 = smul.addr %s304, 8
          %s306 = scalar_lea.vmem %s0, %s305
        $region28: #{tpu_custom_call.1} parent=23 // pred_fallthru
          _
        // Predicated region
        $region29: #{tpu_custom_call.1} parent=23 // pred_check
          %p307 = pneg %p86
        $region30: #{tpu_custom_call.1} parent=23 // pred_check_branch
          %309 = sbr.rel (%p307) target = $region32
        $region31: #{tpu_custom_call.1} parent=23 // pred_region
          %p310 = scmp.lt.s32.totalorder %s33, 1
          %s311 = scalar_select %p310, %s33, 1
          %s312 = smul.addr %s311, 8
          %s313 = scalar_lea.vmem %s1, %s312
        $region32: #{tpu_custom_call.1} parent=23 // pred_fallthru
          _
        // Predicated region
        $region33: #{tpu_custom_call.1} parent=23 // pred_check
          %p314 = pneg %p112
        $region34: #{tpu_custom_call.1} parent=23 // pred_check_branch
          %316 = sbr.rel (%p314) target = $region36
        $region35: #{tpu_custom_call.1} parent=23 // pred_region
          %s317 = sand.u32 %s102, 1
          %s318 = scalar_lea.sflag [#allocation3], %s317
          %s319 = sand.u32 %s102, 1
          %s320 = smul.addr %s319, 8
          %s321 = scalar_lea.vmem [#allocation2], %s320
          %323 = vsyncadd %s318, 0
          %s324 = smul.addr %s33, 8
          %s325 = scalar_lea.hbm %s2, %s324
          %s327 = sshll.u32 %s325, 4
          %s328 = int_to_ptr.hbm [resolvable:$true] %s327
          %s329 = sshll.u32 %s321, 4
          %s330 = int_to_ptr.vmem [resolvable:$true] %s329
          %332 = dma.hbm_to_vmem [thread:$0]  %s328, 128, %s330, %s318
        $region36: #{tpu_custom_call.1} parent=23 // pred_fallthru
          _
        // Predicated region
        $region37: #{tpu_custom_call.1} parent=23 // pred_check
          %p333 = pneg %p140
        $region38: #{tpu_custom_call.1} parent=23 // pred_check_branch
          %335 = sbr.rel (%p333) target = $region40
        $region39: #{tpu_custom_call.1} parent=23 // pred_region
          %s336 = sand.u32 %s26, 1
          %s337 = scalar_lea.sflag [#allocation6], %s336
          %s338 = sand.u32 %s130, 1
          %s339 = smul.addr %s338, 32
          %s340 = scalar_lea.vmem [#allocation5], %s339
          %s341 = smul.u32 8, %s34
          %343 = vsyncadd %s337, 0
          %s344 = smul.addr %s33, 8
          %s345 = sadd.s32 %s341, %s344
          %s346 = smul.addr %s345, 4
          %s347 = scalar_lea.hbm %s3, %s346
          %s348 = sshll.u32 %s347, 4
          %s349 = int_to_ptr.hbm [resolvable:$true] %s348
          %s350 = sshll.u32 %s340, 4
          %s351 = int_to_ptr.vmem [resolvable:$true] %s350
          %356 = dma.hbm_to_vmem [thread:$0]  %s349, 512, %s351, %s337, 64, 64, 4
        $region40: #{tpu_custom_call.1} parent=23 // pred_fallthru
          _
        // Predicated region
        $region41: #{tpu_custom_call.1} parent=23 // pred_check
          %p357 = pneg %p168
        $region42: #{tpu_custom_call.1} parent=23 // pred_check_branch
          %359 = sbr.rel (%p357) target = $region44
        $region43: #{tpu_custom_call.1} parent=23 // pred_region
          %s360 = sand.u32 %s26, 1
          %s361 = scalar_lea.sflag [#allocation6], %s360
          %s362 = sand.u32 %s158, 1
          %s363 = smul.addr %s362, 32
          %s364 = scalar_lea.vmem [#allocation7], %s363
          %s365 = smul.u32 8, %s34
          %367 = vsyncadd %s361, 0
          %s368 = smul.addr %s33, 8
          %s369 = sadd.s32 %s365, %s368
          %s370 = smul.addr %s369, 4
          %s371 = scalar_lea.hbm %s4, %s370
          %s372 = sshll.u32 %s371, 4
          %s373 = int_to_ptr.hbm [resolvable:$true] %s372
          %s374 = sshll.u32 %s364, 4
          %s375 = int_to_ptr.vmem [resolvable:$true] %s374
          %380 = dma.hbm_to_vmem [thread:$0]  %s373, 512, %s375, %s361, 64, 64, 4
        $region44: #{tpu_custom_call.1} parent=23 // pred_fallthru
          _
        // Predicated region
        $region45: #{tpu_custom_call.1} parent=23 // pred_check
          %p381 = pneg %p196
        $region46: #{tpu_custom_call.1} parent=23 // pred_check_branch
          %383 = sbr.rel (%p381) target = $region48
        $region47: #{tpu_custom_call.1} parent=23 // pred_region
          %s384 = sand.u32 %s186, 1
          %s385 = scalar_lea.sflag [#allocation9], %s384
          %s386 = sand.u32 %s186, 1
          %s387 = smul.addr %s386, 8
          %s388 = scalar_lea.vmem [#allocation8], %s387
          %390 = vsyncadd %s385, 0
          %s391 = sadd.s32 %s34, %s33
          %s392 = smul.addr %s391, 8
          %s393 = scalar_lea.hbm %s5, %s392
          %s395 = sshll.u32 %s393, 4
          %s396 = int_to_ptr.hbm [resolvable:$true] %s395
          %s397 = sshll.u32 %s388, 4
          %s398 = int_to_ptr.vmem [resolvable:$true] %s397
          %400 = dma.hbm_to_vmem [thread:$0]  %s396, 128, %s398, %s385
        $region48: #{tpu_custom_call.1} parent=23 // pred_fallthru
          _
      $region24: #{tpu_custom_call.1} parent=5 // pred_fallthru
        _
      %p401 = scmp.le.s32.totalorder 1, %s26
      %p402 = scmp.lt.s32.totalorder %s26, 3
      %p403 = pnand %p401, %p402
      %p404 = pneg %p403
      // Predicated region
      $region49: #{tpu_custom_call.1} parent=5 // pred_check
        _
      $region50: #{tpu_custom_call.1} parent=5 // pred_check_branch
        %406 = sbr.rel (%p403) target = $region52
      $region51: #{tpu_custom_call.1} parent=5 // pred_region
        %s407 = ssub.s32 %s26, 1
        %s408 = sand.u32 %s105, 1
        %s409 = scalar_lea.sflag [#allocation3], %s408
        %s410 = sand.u32 %s105, 1
        %s411 = smul.addr %s410, 8
        %s412 = scalar_lea.vmem [#allocation2], %s411
        // Predicated region
        $region53: #{tpu_custom_call.1} parent=51 // pred_check
          %p413 = pneg %p118
        $region54: #{tpu_custom_call.1} parent=51 // pred_check_branch
          %415 = sbr.rel (%p413) target = $region56
        $region55: #{tpu_custom_call.1} parent=51 // pred_region
          %417 = dma.done %s409, 128
        $region56: #{tpu_custom_call.1} parent=51 // pred_fallthru
          _
        %s418 = sand.u32 %s31, 1
        %s419 = scalar_lea.sflag [#allocation6], %s418
        %s420 = sand.u32 %s133, 1
        %s421 = smul.addr %s420, 32
        %s422 = scalar_lea.vmem [#allocation5], %s421
        // Predicated region
        $region57: #{tpu_custom_call.1} parent=51 // pred_check
          %p423 = pneg %p146
        $region58: #{tpu_custom_call.1} parent=51 // pred_check_branch
          %425 = sbr.rel (%p423) target = $region60
        $region59: #{tpu_custom_call.1} parent=51 // pred_region
          %427 = dma.done %s419, 512
        $region60: #{tpu_custom_call.1} parent=51 // pred_fallthru
          _
        %s428 = sand.u32 %s31, 1
        %s429 = scalar_lea.sflag [#allocation6], %s428
        %s430 = sand.u32 %s161, 1
        %s431 = smul.addr %s430, 32
        %s432 = scalar_lea.vmem [#allocation7], %s431
        // Predicated region
        $region61: #{tpu_custom_call.1} parent=51 // pred_check
          %p433 = pneg %p174
        $region62: #{tpu_custom_call.1} parent=51 // pred_check_branch
          %435 = sbr.rel (%p433) target = $region64
        $region63: #{tpu_custom_call.1} parent=51 // pred_region
          %437 = dma.done %s429, 512
        $region64: #{tpu_custom_call.1} parent=51 // pred_fallthru
          _
        %s438 = sand.u32 %s189, 1
        %s439 = scalar_lea.sflag [#allocation9], %s438
        %s440 = sand.u32 %s189, 1
        %s441 = smul.addr %s440, 8
        %s442 = scalar_lea.vmem [#allocation8], %s441
        // Predicated region
        $region65: #{tpu_custom_call.1} parent=51 // pred_check
          %p443 = pneg %p202
        $region66: #{tpu_custom_call.1} parent=51 // pred_check_branch
          %445 = sbr.rel (%p443) target = $region68
        $region67: #{tpu_custom_call.1} parent=51 // pred_region
          %447 = dma.done %s439, 128
        $region68: #{tpu_custom_call.1} parent=51 // pred_fallthru
          _
        %p448 = scmp.lt.s32.totalorder %s35, 1
        %s449 = scalar_select %p448, %s35, 1
        %p450 = scmp.lt.s32.totalorder %s36, 0
        %s451 = scalar_select %p450, %s36, 0
        %s452 = sadd.s32 %s451, %s449
        %s453 = smul.addr %s452, 8
        %s454 = scalar_lea.vmem %s0, %s453
        %p455 = pneg %p66
        %p456 = pneg %p63
        %p457 = scmp.lt.s32.totalorder %s35, 1
        %s458 = scalar_select %p457, %s35, 1
        %s459 = smul.addr %s458, 8
        %s460 = scalar_lea.vmem %s1, %s459
        %p461 = pneg %p92
        %p462 = pneg %p89
        %s463 = sand.u32 %s105, 1
        %s464 = scalar_lea.sflag [#allocation3], %s463
        %s465 = sand.u32 %s105, 1
        %s466 = smul.addr %s465, 8
        %s467 = scalar_lea.vmem [#allocation2], %s466
        %p468 = pneg %p118
        %p469 = pneg %p115
        %s470 = sand.u32 %s31, 1
        %s471 = scalar_lea.sflag [#allocation6], %s470
        %s472 = sand.u32 %s133, 1
        %s473 = smul.addr %s472, 32
        %s474 = scalar_lea.vmem [#allocation5], %s473
        %p475 = pneg %p146
        %p476 = pneg %p143
        %s477 = sand.u32 %s31, 1
        %s478 = scalar_lea.sflag [#allocation6], %s477
        %s479 = sand.u32 %s161, 1
        %s480 = smul.addr %s479, 32
        %s481 = scalar_lea.vmem [#allocation7], %s480
        %p482 = pneg %p174
        %p483 = pneg %p171
        %s484 = sand.u32 %s189, 1
        %s485 = scalar_lea.sflag [#allocation9], %s484
        %s486 = sand.u32 %s189, 1
        %s487 = smul.addr %s486, 8
        %s488 = scalar_lea.vmem [#allocation8], %s487
        %p489 = pneg %p202
        %p490 = pneg %p199
        %p491 = pneg %p223
        %p492 = pneg %p220
        %p493 = pneg %p244
        %p494 = pneg %p241
        %p495 = pneg %p272
        %p496 = pneg %p269
        %s497 = sand.u32 %s259, 1
        %s498 = scalar_lea.sflag [#allocation4], %s497
        %s499 = sand.u32 %s259, 1
        %s500 = smul.addr %s499, 8
        %s501 = scalar_lea.vmem [#allocation10], %s500
        %p502 = scmp.lt.s32.totalorder %s35, 1
        %s503 = scalar_select %p502, %s35, 1
        %p504 = scmp.lt.s32.totalorder %s36, 0
        %s505 = scalar_select %p504, %s36, 0
        %s506 = sadd.s32 %s505, %s503
        %s507 = smul.addr %s506, 8
        %s508 = scalar_lea.vmem %s0, %s507
        %p509 = scmp.lt.s32.totalorder %s35, 1
        %s510 = scalar_select %p509, %s35, 1
        %s511 = smul.addr %s510, 8
        %s512 = scalar_lea.vmem %s1, %s511
        %s513 = smul.u32 8, %s36
        %s514 = smul.u32 8, %s36
        %v515 = vld [vmem:[%s508] sm:$0xff]
        %v516 = vld [vmem:[%s512] sm:$0xff]
        %v517 = vld [vmem:[%s412] sm:$0xff]
        %v518 = vld [vmem:[%s422] sm:$0xf]
        %v519 = vld [vmem:[%s422 + $0x4] sm:$0xf]
        %v520 = vld [vmem:[%s422 + $0x8] sm:$0xf]
        %v521 = vld [vmem:[%s422 + $0xc] sm:$0xf]
        %v522 = vld [vmem:[%s422 + $0x10] sm:$0xf]
        %v523 = vld [vmem:[%s422 + $0x14] sm:$0xf]
        %v524 = vld [vmem:[%s422 + $0x18] sm:$0xf]
        %v525 = vld [vmem:[%s422 + $0x1c] sm:$0xf]
        %v526 = vunpack.c.l.bf16 %v518
        %v527 = vunpack.c.l.bf16 %v519
        %v528 = vunpack.c.l.bf16 %v520
        %v529 = vunpack.c.l.bf16 %v521
        %v530 = vunpack.c.l.bf16 %v522
        %v531 = vunpack.c.l.bf16 %v523
        %v532 = vunpack.c.l.bf16 %v524
        %v533 = vunpack.c.l.bf16 %v525
        %v534 = vld [vmem:[%s432] sm:$0xf]
        %v535 = vld [vmem:[%s432 + $0x4] sm:$0xf]
        %v536 = vld [vmem:[%s432 + $0x8] sm:$0xf]
        %v537 = vld [vmem:[%s432 + $0xc] sm:$0xf]
        %v538 = vld [vmem:[%s432 + $0x10] sm:$0xf]
        %v539 = vld [vmem:[%s432 + $0x14] sm:$0xf]
        %v540 = vld [vmem:[%s432 + $0x18] sm:$0xf]
        %v541 = vld [vmem:[%s432 + $0x1c] sm:$0xf]
        %v542 = vunpack.c.l.bf16 %v534
        %v543 = vunpack.c.l.bf16 %v535
        %v544 = vunpack.c.l.bf16 %v536
        %v545 = vunpack.c.l.bf16 %v537
        %v546 = vunpack.c.l.bf16 %v538
        %v547 = vunpack.c.l.bf16 %v539
        %v548 = vunpack.c.l.bf16 %v540
        %v549 = vunpack.c.l.bf16 %v541
        %v550 = vld [vmem:[%s6] sm:$0xff]
        %v551 = vld [vmem:[%s6 + $0x8] sm:$0xff]
        %v552 = vld [vmem:[%s6 + $0x10] sm:$0xff]
        %v553 = vld [vmem:[%s6 + $0x18] sm:$0xff]
        %v554 = vld [vmem:[%s7] sm:$0xf]
        %v555 = vld [vmem:[%s442] sm:$0xff]
        %vm556 = vcmp.eq.s32.totalorder %v555, 0
        %v557 = vsel %vm556, -1e+30, 0.0
        %v559 = vrot.slane %v515, 1
        %v560 = vrot.slane %v515, 2
        %v561 = vrot.slane %v515, 3
        %v562 = vrot.slane %v515, 4
        %v563 = vrot.slane %v515, 5
        %v564 = vrot.slane %v515, 6
        %v565 = vrot.slane %v515, 7
        %v566 = vadd.f32 %v516, %v526
        %v567 = vadd.f32 %v516, %v527
        %v568 = vadd.f32 %v516, %v528
        %v569 = vadd.f32 %v516, %v529
        %v570 = vadd.f32 %v516, %v530
        %v571 = vadd.f32 %v516, %v531
        %v572 = vadd.f32 %v516, %v532
        %v573 = vadd.f32 %v516, %v533
        %v574 = vperm.slane %v515, 0
        %v575 = vperm.slane %v559, 0
        %v576 = vperm.slane %v560, 0
        %v577 = vperm.slane %v561, 0
        %v578 = vperm.slane %v562, 0
        %v579 = vperm.slane %v563, 0
        %v580 = vperm.slane %v564, 0
        %v581 = vperm.slane %v565, 0
        %v590 = vmul.f32 %v574, %v566
        %v591 = vmul.f32 %v575, %v567
        %v592 = vmul.f32 %v576, %v568
        %v593 = vmul.f32 %v577, %v569
        %v594 = vmul.f32 %v578, %v570
        %v595 = vmul.f32 %v579, %v571
        %v596 = vmul.f32 %v580, %v572
        %v597 = vmul.f32 %v581, %v573
        %vm598 = vcmask 261120
        %v600 = vsel %vm598, %v590, 0
        %v603 = vsel %vm598, %v591, 0
        %v606 = vsel %vm598, %v592, 0
        %v609 = vsel %vm598, %v593, 0
        %v612 = vsel %vm598, %v594, 0
        %v615 = vsel %vm598, %v595, 0
        %v618 = vsel %vm598, %v596, 0
        %v621 = vsel %vm598, %v597, 0
        %623 = vmatpush.msra.mxu0 0.0
        %624 = vmatpush.msra.mxu0 0.0
        %625 = vmatpush.msra.mxu0 0.0
        %626 = vmatpush.msra.mxu0 0.0
        %627 = vmatpush.msra.mxu0 0.0
        %628 = vmatpush.msra.mxu0 0.0
        %629 = vmatpush.msra.mxu0 0.0
        %630 = vmatpush.msra.mxu0 0.0
        %631 = vmatpush.msra.mxu0 0.0
        %632 = vmatpush.msra.mxu0 0.0
        %633 = vmatpush.msra.mxu0 0.0
        %634 = vmatpush.msra.mxu0 0.0
        %635 = vmatpush.msra.mxu0 %v553
        %636 = vmatpush.msra.mxu0 %v552
        %637 = vmatpush.msra.mxu0 %v551
        %638 = vmatpush.msra.mxu0 %v550
        %639 = vmatmul.f32.gmra.mxu0 %v600
        %v640 = vpop.f32.mrf.mxu0
        %v641 = vadd.f32 0.0, %v640
        %642 = vmatmul.f32.gmra.mxu0 %v603
        %v643 = vpop.f32.mrf.mxu0
        %v644 = vadd.f32 0.0, %v643
        %645 = vmatmul.f32.gmra.mxu0 %v606
        %v646 = vpop.f32.mrf.mxu0
        %v647 = vadd.f32 0.0, %v646
        %648 = vmatmul.f32.gmra.mxu0 %v609
        %v649 = vpop.f32.mrf.mxu0
        %v650 = vadd.f32 0.0, %v649
        %651 = vmatmul.f32.gmra.mxu0 %v612
        %v652 = vpop.f32.mrf.mxu0
        %v653 = vadd.f32 0.0, %v652
        %654 = vmatmul.f32.gmra.mxu0 %v615
        %v655 = vpop.f32.mrf.mxu0
        %v656 = vadd.f32 0.0, %v655
        %657 = vmatmul.f32.gmra.mxu0 %v618
        %v658 = vpop.f32.mrf.mxu0
        %v659 = vadd.f32 0.0, %v658
        %660 = vmatmul.f32.gmra.mxu0 %v621
        %v661 = vpop.f32.mrf.mxu0
        %v662 = vadd.f32 0.0, %v661
        %663 = vdwg.mxu0
        %v664 = vperm.slane %v557, 0
        %v665 = vlaneseq
        %v666 = vshrl.u32 %v665, 7
        %668 = vset.pattern.permute.xlu0 %v666
        %669 = vperm.xlu0 %668, %v664
        %v670 = vpop.permute.xlu0 %669
        %v671 = vperm.slane %v557, 1
        %v672 = vlaneseq
        %v673 = vshrl.u32 %v672, 7
        %675 = vset.pattern.permute.xlu0 %v673
        %676 = vperm.xlu0 %675, %v671
        %v677 = vpop.permute.xlu0 %676
        %v678 = vperm.slane %v557, 2
        %v679 = vlaneseq
        %v680 = vshrl.u32 %v679, 7
        %682 = vset.pattern.permute.xlu0 %v680
        %683 = vperm.xlu0 %682, %v678
        %v684 = vpop.permute.xlu0 %683
        %v685 = vperm.slane %v557, 3
        %v686 = vlaneseq
        %v687 = vshrl.u32 %v686, 7
        %689 = vset.pattern.permute.xlu0 %v687
        %690 = vperm.xlu0 %689, %v685
        %v691 = vpop.permute.xlu0 %690
        %v692 = vperm.slane %v557, 4
        %v693 = vlaneseq
        %v694 = vshrl.u32 %v693, 7
        %696 = vset.pattern.permute.xlu0 %v694
        %697 = vperm.xlu0 %696, %v692
        %v698 = vpop.permute.xlu0 %697
        %v699 = vperm.slane %v557, 5
        %v700 = vlaneseq
        %v701 = vshrl.u32 %v700, 7
        %703 = vset.pattern.permute.xlu0 %v701
        %704 = vperm.xlu0 %703, %v699
        %v705 = vpop.permute.xlu0 %704
        %v706 = vperm.slane %v557, 6
        %v707 = vlaneseq
        %v708 = vshrl.u32 %v707, 7
        %710 = vset.pattern.permute.xlu0 %v708
        %711 = vperm.xlu0 %710, %v706
        %v712 = vpop.permute.xlu0 %711
        %v713 = vperm.slane %v557, 7
        %v714 = vlaneseq
        %v715 = vshrl.u32 %v714, 7
        %717 = vset.pattern.permute.xlu0 %v715
        %718 = vperm.xlu0 %717, %v713
        %v719 = vpop.permute.xlu0 %718
        %v720 = vadd.f32 %v641, %v670
        %v721 = vadd.f32 %v644, %v677
        %v722 = vadd.f32 %v647, %v684
        %v723 = vadd.f32 %v650, %v691
        %v724 = vadd.f32 %v653, %v698
        %v725 = vadd.f32 %v656, %v705
        %v726 = vadd.f32 %v659, %v712
        %v727 = vadd.f32 %v662, %v719
        %vm728 = vcmask 31744
        %v729 = vsel %vm728, %v720, -inf
        %v730 = vrot.slane %v729, 4
        %v731 = vmax.f32 %v729, %v730
        %v732 = vrot.slane %v731, 2
        %v733 = vmax.f32 %v731, %v732
        %v734 = vrot.slane %v733, 1
        %v735 = vmax.f32 %v733, %v734
        %v736 = vsel %vm728, %v721, -inf
        %v737 = vrot.slane %v736, 4
        %v738 = vmax.f32 %v736, %v737
        %v739 = vrot.slane %v738, 2
        %v740 = vmax.f32 %v738, %v739
        %v741 = vrot.slane %v740, 1
        %v742 = vmax.f32 %v740, %v741
        %v743 = vsel %vm728, %v722, -inf
        %v744 = vrot.slane %v743, 4
        %v745 = vmax.f32 %v743, %v744
        %v746 = vrot.slane %v745, 2
        %v747 = vmax.f32 %v745, %v746
        %v748 = vrot.slane %v747, 1
        %v749 = vmax.f32 %v747, %v748
        %v750 = vsel %vm728, %v723, -inf
        %v751 = vrot.slane %v750, 4
        %v752 = vmax.f32 %v750, %v751
        %v753 = vrot.slane %v752, 2
        %v754 = vmax.f32 %v752, %v753
        %v755 = vrot.slane %v754, 1
        %v756 = vmax.f32 %v754, %v755
        %v757 = vsel %vm728, %v724, -inf
        %v758 = vrot.slane %v757, 4
        %v759 = vmax.f32 %v757, %v758
        %v760 = vrot.slane %v759, 2
        %v761 = vmax.f32 %v759, %v760
        %v762 = vrot.slane %v761, 1
        %v763 = vmax.f32 %v761, %v762
        %v764 = vsel %vm728, %v725, -inf
        %v765 = vrot.slane %v764, 4
        %v766 = vmax.f32 %v764, %v765
        %v767 = vrot.slane %v766, 2
        %v768 = vmax.f32 %v766, %v767
        %v769 = vrot.slane %v768, 1
        %v770 = vmax.f32 %v768, %v769
        %v771 = vsel %vm728, %v726, -inf
        %v772 = vrot.slane %v771, 4
        %v773 = vmax.f32 %v771, %v772
        %v774 = vrot.slane %v773, 2
        %v775 = vmax.f32 %v773, %v774
        %v776 = vrot.slane %v775, 1
        %v777 = vmax.f32 %v775, %v776
        %v778 = vsel %vm728, %v727, -inf
        %v779 = vrot.slane %v778, 4
        %v780 = vmax.f32 %v778, %v779
        %v781 = vrot.slane %v780, 2
        %v782 = vmax.f32 %v780, %v781
        %v783 = vrot.slane %v782, 1
        %v784 = vmax.f32 %v782, %v783
        %v785 = vsub.f32 %v720, %v735
        %v786 = vsub.f32 %v721, %v742
        %v787 = vsub.f32 %v722, %v749
        %v788 = vsub.f32 %v723, %v756
        %v789 = vsub.f32 %v724, %v763
        %v790 = vsub.f32 %v725, %v770
        %v791 = vsub.f32 %v726, %v777
        %v792 = vsub.f32 %v727, %v784
        %v793 = vmul.f32 %v785, 1.442695
        %v794 = vpow.pop %v793
        %v795 = vmul.f32 %v786, 1.442695
        %v796 = vpow.pop %v795
        %v797 = vmul.f32 %v787, 1.442695
        %v798 = vpow.pop %v797
        %v799 = vmul.f32 %v788, 1.442695
        %v800 = vpow.pop %v799
        %v801 = vmul.f32 %v789, 1.442695
        %v802 = vpow.pop %v801
        %v803 = vmul.f32 %v790, 1.442695
        %v804 = vpow.pop %v803
        %v805 = vmul.f32 %v791, 1.442695
        %v806 = vpow.pop %v805
        %v807 = vmul.f32 %v792, 1.442695
        %v808 = vpow.pop %v807
        %v809 = vsel %vm728, %v794, 0.0
        %v810 = vrot.slane %v809, 4
        %v811 = vadd.f32 %v809, %v810
        %v812 = vrot.slane %v811, 2
        %v813 = vadd.f32 %v811, %v812
        %v814 = vrot.slane %v813, 1
        %v815 = vadd.f32 %v813, %v814
        %v816 = vsel %vm728, %v796, 0.0
        %v817 = vrot.slane %v816, 4
        %v818 = vadd.f32 %v816, %v817
        %v819 = vrot.slane %v818, 2
        %v820 = vadd.f32 %v818, %v819
        %v821 = vrot.slane %v820, 1
        %v822 = vadd.f32 %v820, %v821
        %v823 = vsel %vm728, %v798, 0.0
        %v824 = vrot.slane %v823, 4
        %v825 = vadd.f32 %v823, %v824
        %v826 = vrot.slane %v825, 2
        %v827 = vadd.f32 %v825, %v826
        %v828 = vrot.slane %v827, 1
        %v829 = vadd.f32 %v827, %v828
        %v830 = vsel %vm728, %v800, 0.0
        %v831 = vrot.slane %v830, 4
        %v832 = vadd.f32 %v830, %v831
        %v833 = vrot.slane %v832, 2
        %v834 = vadd.f32 %v832, %v833
        %v835 = vrot.slane %v834, 1
        %v836 = vadd.f32 %v834, %v835
        %v837 = vsel %vm728, %v802, 0.0
        %v838 = vrot.slane %v837, 4
        %v839 = vadd.f32 %v837, %v838
        %v840 = vrot.slane %v839, 2
        %v841 = vadd.f32 %v839, %v840
        %v842 = vrot.slane %v841, 1
        %v843 = vadd.f32 %v841, %v842
        %v844 = vsel %vm728, %v804, 0.0
        %v845 = vrot.slane %v844, 4
        %v846 = vadd.f32 %v844, %v845
        %v847 = vrot.slane %v846, 2
        %v848 = vadd.f32 %v846, %v847
        %v849 = vrot.slane %v848, 1
        %v850 = vadd.f32 %v848, %v849
        %v851 = vsel %vm728, %v806, 0.0
        %v852 = vrot.slane %v851, 4
        %v853 = vadd.f32 %v851, %v852
        %v854 = vrot.slane %v853, 2
        %v855 = vadd.f32 %v853, %v854
        %v856 = vrot.slane %v855, 1
        %v857 = vadd.f32 %v855, %v856
        %v858 = vsel %vm728, %v808, 0.0
        %v859 = vrot.slane %v858, 4
        %v860 = vadd.f32 %v858, %v859
        %v861 = vrot.slane %v860, 2
        %v862 = vadd.f32 %v860, %v861
        %v863 = vrot.slane %v862, 1
        %v864 = vadd.f32 %v862, %v863
        %v865 = vrcp.pop %v815
        %v866 = vrcp.pop %v822
        %v867 = vrcp.pop %v829
        %v868 = vrcp.pop %v836
        %v869 = vrcp.pop %v843
        %v870 = vrcp.pop %v850
        %v871 = vrcp.pop %v857
        %v872 = vrcp.pop %v864
        %v873 = vmul.f32 %v794, %v865
        %v874 = vmul.f32 %v796, %v866
        %v875 = vmul.f32 %v798, %v867
        %v876 = vmul.f32 %v800, %v868
        %v877 = vmul.f32 %v802, %v869
        %v878 = vmul.f32 %v804, %v870
        %v879 = vmul.f32 %v806, %v871
        %v880 = vmul.f32 %v808, %v872
        %v882 = vsel %vm728, %v873, 0
        %v885 = vsel %vm728, %v874, 0
        %v888 = vsel %vm728, %v875, 0
        %v891 = vsel %vm728, %v876, 0
        %v894 = vsel %vm728, %v877, 0
        %v897 = vsel %vm728, %v878, 0
        %v900 = vsel %vm728, %v879, 0
        %v903 = vsel %vm728, %v880, 0
        %vm905 = vcmask 1043456
        %v907 = vsel %vm905, %v554, 0
        %909 = vmatpush.msra.mxu0 0.0
        %910 = vmatpush.msra.mxu0 0.0
        %911 = vmatpush.msra.mxu0 0.0
        %912 = vmatpush.msra.mxu0 0.0
        %913 = vmatpush.msra.mxu0 0.0
        %914 = vmatpush.msra.mxu0 0.0
        %915 = vmatpush.msra.mxu0 0.0
        %916 = vmatpush.msra.mxu0 0.0
        %917 = vmatpush.msra.mxu0 0.0
        %918 = vmatpush.msra.mxu0 0.0
        %919 = vmatpush.msra.mxu0 0.0
        %920 = vmatpush.msra.mxu0 0.0
        %921 = vmatpush.msra.mxu0 0.0
        %922 = vmatpush.msra.mxu0 0.0
        %923 = vmatpush.msra.mxu0 0.0
        %924 = vmatpush.msra.mxu0 %v907
        %925 = vmatmul.f32.gmra.mxu0 %v882
        %v926 = vpop.f32.mrf.mxu0
        %v927 = vadd.f32 0.0, %v926
        %928 = vmatmul.f32.gmra.mxu0 %v885
        %v929 = vpop.f32.mrf.mxu0
        %v930 = vadd.f32 0.0, %v929
        %931 = vmatmul.f32.gmra.mxu0 %v888
        %v932 = vpop.f32.mrf.mxu0
        %v933 = vadd.f32 0.0, %v932
        %934 = vmatmul.f32.gmra.mxu0 %v891
        %v935 = vpop.f32.mrf.mxu0
        %v936 = vadd.f32 0.0, %v935
        %937 = vmatmul.f32.gmra.mxu0 %v894
        %v938 = vpop.f32.mrf.mxu0
        %v939 = vadd.f32 0.0, %v938
        %940 = vmatmul.f32.gmra.mxu0 %v897
        %v941 = vpop.f32.mrf.mxu0
        %v942 = vadd.f32 0.0, %v941
        %943 = vmatmul.f32.gmra.mxu0 %v900
        %v944 = vpop.f32.mrf.mxu0
        %v945 = vadd.f32 0.0, %v944
        %946 = vmatmul.f32.gmra.mxu0 %v903
        %v947 = vpop.f32.mrf.mxu0
        %v948 = vadd.f32 0.0, %v947
        %949 = vdwg.mxu0
        %v950 = vadd.f32 %v517, %v542
        %v951 = vadd.f32 %v517, %v543
        %v952 = vadd.f32 %v517, %v544
        %v953 = vadd.f32 %v517, %v545
        %v954 = vadd.f32 %v517, %v546
        %v955 = vadd.f32 %v517, %v547
        %v956 = vadd.f32 %v517, %v548
        %v957 = vadd.f32 %v517, %v549
        %v958 = vmul.f32 %v927, %v950
        %v959 = vmul.f32 %v930, %v951
        %v960 = vmul.f32 %v933, %v952
        %v961 = vmul.f32 %v936, %v953
        %v962 = vmul.f32 %v939, %v954
        %v963 = vmul.f32 %v942, %v955
        %v964 = vmul.f32 %v945, %v956
        %v965 = vmul.f32 %v948, %v957
        %v966 = vsel %vm598, %v958, 0.0
        %v967 = vrot.slane %v966, 4
        %v968 = vadd.f32 %v966, %v967
        %v969 = vrot.slane %v968, 2
        %v970 = vadd.f32 %v968, %v969
        %v971 = vrot.slane %v970, 1
        %v972 = vadd.f32 %v970, %v971
        %v973 = vsel %vm598, %v959, 0.0
        %v974 = vrot.slane %v973, 4
        %v975 = vadd.f32 %v973, %v974
        %v976 = vrot.slane %v975, 2
        %v977 = vadd.f32 %v975, %v976
        %v978 = vrot.slane %v977, 1
        %v979 = vadd.f32 %v977, %v978
        %v980 = vsel %vm598, %v960, 0.0
        %v981 = vrot.slane %v980, 4
        %v982 = vadd.f32 %v980, %v981
        %v983 = vrot.slane %v982, 2
        %v984 = vadd.f32 %v982, %v983
        %v985 = vrot.slane %v984, 1
        %v986 = vadd.f32 %v984, %v985
        %v987 = vsel %vm598, %v961, 0.0
        %v988 = vrot.slane %v987, 4
        %v989 = vadd.f32 %v987, %v988
        %v990 = vrot.slane %v989, 2
        %v991 = vadd.f32 %v989, %v990
        %v992 = vrot.slane %v991, 1
        %v993 = vadd.f32 %v991, %v992
        %v994 = vsel %vm598, %v962, 0.0
        %v995 = vrot.slane %v994, 4
        %v996 = vadd.f32 %v994, %v995
        %v997 = vrot.slane %v996, 2
        %v998 = vadd.f32 %v996, %v997
        %v999 = vrot.slane %v998, 1
        %v1000 = vadd.f32 %v998, %v999
        %v1001 = vsel %vm598, %v963, 0.0
        %v1002 = vrot.slane %v1001, 4
        %v1003 = vadd.f32 %v1001, %v1002
        %v1004 = vrot.slane %v1003, 2
        %v1005 = vadd.f32 %v1003, %v1004
        %v1006 = vrot.slane %v1005, 1
        %v1007 = vadd.f32 %v1005, %v1006
        %v1008 = vsel %vm598, %v964, 0.0
        %v1009 = vrot.slane %v1008, 4
        %v1010 = vadd.f32 %v1008, %v1009
        %v1011 = vrot.slane %v1010, 2
        %v1012 = vadd.f32 %v1010, %v1011
        %v1013 = vrot.slane %v1012, 1
        %v1014 = vadd.f32 %v1012, %v1013
        %v1015 = vsel %vm598, %v965, 0.0
        %v1016 = vrot.slane %v1015, 4
        %v1017 = vadd.f32 %v1015, %v1016
        %v1018 = vrot.slane %v1017, 2
        %v1019 = vadd.f32 %v1017, %v1018
        %v1020 = vrot.slane %v1019, 1
        %v1021 = vadd.f32 %v1019, %v1020
        %vm1030 = vcmask 1041409
        %v1031 = vsel %vm1030, %v979, %v972
        %vm1032 = vcmask 1042434
        %v1033 = vsel %vm1032, %v986, %v1031
        %vm1034 = vcmask 1043459
        %v1035 = vsel %vm1034, %v993, %v1033
        %vm1036 = vcmask 1044484
        %v1037 = vsel %vm1036, %v1000, %v1035
        %vm1038 = vcmask 1045509
        %v1039 = vsel %vm1038, %v1007, %v1037
        %vm1040 = vcmask 1046534
        %v1041 = vsel %vm1040, %v1014, %v1039
        %vm1042 = vcmask 1047559
        %v1043 = vsel %vm1042, %v1021, %v1041
        %1045 = vst.msk [vmem:[%s501] sm:$0xff] %vm598, %v1043
        %s1046 = sand.u32 %s259, 1
        %s1047 = scalar_lea.sflag [#allocation4], %s1046
        %s1048 = sand.u32 %s259, 1
        %s1049 = smul.addr %s1048, 8
        %s1050 = scalar_lea.vmem [#allocation10], %s1049
        // Predicated region
        $region69: #{tpu_custom_call.1} parent=51 // pred_check
          %p1051 = pneg %p269
        $region70: #{tpu_custom_call.1} parent=51 // pred_check_branch
          %1053 = sbr.rel (%p1051) target = $region72
        $region71: #{tpu_custom_call.1} parent=51 // pred_region
          %1055 = vsyncadd %s1047, 0
          %s1056 = sadd.s32 %s36, %s35
          %s1057 = smul.addr %s1056, 8
          %s1058 = scalar_lea.hbm %s8, %s1057
          %s1060 = sshll.u32 %s1050, 4
          %s1061 = int_to_ptr.vmem [resolvable:$true] %s1060
          %s1062 = sshll.u32 %s1058, 4
          %s1063 = int_to_ptr.hbm [resolvable:$true] %s1062
          %1065 = dma.vmem_to_hbm [thread:$0]  %s1061, 128, %s1063, %s1047
        $region72: #{tpu_custom_call.1} parent=51 // pred_fallthru
          _
      $region52: #{tpu_custom_call.1} parent=5 // pred_fallthru
        _
      %p1066 = scmp.le.s32.totalorder 2, %s26
      // Predicated region
      $region73: #{tpu_custom_call.1} parent=5 // pred_check
        %p1067 = pneg %p1066
      $region74: #{tpu_custom_call.1} parent=5 // pred_check_branch
        %1069 = sbr.rel (%p1067) target = $region76
      $region75: #{tpu_custom_call.1} parent=5 // pred_region
        %s1070 = ssub.s32 %s26, 2
        // Predicated region
        $region77: #{tpu_custom_call.1} parent=75 // pred_check
          %p1071 = pneg %p275
        $region78: #{tpu_custom_call.1} parent=75 // pred_check_branch
          %1073 = sbr.rel (%p1071) target = $region80
        $region79: #{tpu_custom_call.1} parent=75 // pred_region
          %s1074 = sand.u32 %s260, 1
          %s1075 = scalar_lea.sflag [#allocation4], %s1074
          %s1076 = sand.u32 %s260, 1
          %s1077 = smul.addr %s1076, 8
          %s1078 = scalar_lea.vmem [#allocation10], %s1077
          %1080 = dma.done %s1075, 128
        $region80: #{tpu_custom_call.1} parent=75 // pred_fallthru
          _
      $region76: #{tpu_custom_call.1} parent=5 // pred_fallthru
        _
    $region6: #{tpu_custom_call.1} parent=1 // loop_footer
      %s30 = sadd.s32 1, %s26
    $region7: #{tpu_custom_call.1} parent=1 // loop_footer_branch
      %25 = sbr.rel target = $region3
    $region8: #{tpu_custom_call.1} parent=1 // loop_exit
      _
    %1081 = vsyncpa [#allocation3], 1
    %s1082 = scalar_lea.sflag [#allocation3], 1
    %1083 = vsyncpa %s1082, 1
    %1084 = vsyncpa [#allocation6], 1
    %s1085 = scalar_lea.sflag [#allocation6], 1
    %1086 = vsyncpa %s1085, 1
    %1087 = vsyncpa [#allocation9], 1
    %s1088 = scalar_lea.sflag [#allocation9], 1
    %1089 = vsyncpa %s1088, 1
    %1090 = vsyncpa [#allocation4], 1
    %s1091 = scalar_lea.sflag [#allocation4], 1
    %1092 = vsyncpa %s1091, 1

</llo_original>
